<compile_context>
chip_gen: v7x
topology: tpu7x:2x2x1
jax: 0.10.0
libtpu: 0.0.40
codegen_flags: <defaults>
</compile_context>

<pallas_src>
import numpy as np
import jax
import jax.numpy as jnp
from jax.experimental import pallas as pl
from jax.experimental.pallas import tpu as pltpu


def make_dct_matrix(blocksize: int) -> np.ndarray:
    """DCT-II basis matrix, identical to the PyTorch __init__ (float64)."""
    A = np.zeros((blocksize, blocksize), dtype=np.float64)
    for i in range(blocksize):
        c_i = 1.0 / np.sqrt(2.0) if i == 0 else 1.0
        for n in range(blocksize):
            A[i, n] = (np.sqrt(2.0 / blocksize) * c_i
                       * np.cos((2 * n + 1) / (blocksize * 2) * i * np.pi))
    return A


def make_paired_kron_operator(A: np.ndarray) -> jnp.ndarray:
    """(2*bs^2, 2*bs^2) operator W such that
       [x0_flat | x1_flat] @ W == [ (A x0 A^T).flatten() | (A x1 A^T).flatten() ].
       Uses kron(A, A)[i*bs+j, m*bs+n] = A[i,m] * A[j,n] (row-major vec)."""
    bs = A.shape[0]
    d = bs * bs
    Mt = np.kron(A, A).T                       # row-vector form of y = kron(A,A) @ x
    W = np.zeros((2 * d, 2 * d), dtype=np.float64)
    W[:d, :d] = Mt
    W[d:, d:] = Mt
    return jnp.asarray(W, dtype=jnp.float32)


def _dct_kernel(w_ref, x_ref, o_ref):
    # x_ref: (TR, 128) lane-dense pairs of flattened 8x8 blocks.
    # w_ref: (128, 128) block-diagonal Kronecker DCT operator (resident in VMEM).
    # Single MXU matmul, f32 accumulate, lane-dense unmasked store.
    o_ref[...] = jnp.dot(x_ref[...], w_ref[...],
                         preferred_element_type=jnp.float32).astype(o_ref.dtype)


def dct2d_forward(x: jnp.ndarray, A, blocksize: int = 8,
                  tile_rows: int = 2048) -> jnp.ndarray:
    """Equivalent of Dct2d(blocksize, interleaving=False).forward(x).

    x: (N, 1, H, W) float32, H % blocksize == 0, W % blocksize == 0.
    Returns: (N, k, blocksize, blocksize) with k = (H//bs)*(W//bs).
    """
    N, C, H, W = x.shape
    bs = blocksize
    assert C == 1, 'DCT is only implemented for a single channel'
    assert H >= bs and W >= bs, 'Input too small for blocksize'
    assert H % bs == 0 and W % bs == 0, 'dims must be divisible by blocksize'

    kh, kw = H // bs, W // bs
    k = kh * kw
    B = N * k
    d = bs * bs                    # 64 for bs=8
    lanes = 2 * d                  # 128: two blocks per lane-dense row

    Wop = make_paired_kron_operator(np.asarray(A, dtype=np.float64))

    # torch.nn.Unfold(kernel=bs, stride=bs) equivalent; each block flattened
    # row-major -> (B, 64).  Block ordering matches Unfold (row-major over
    # (kh, kw) per image); within-block ordering is (row, col) row-major.
    xb = (x.reshape(N, kh, bs, kw, bs)
           .transpose(0, 1, 3, 2, 4)
           .reshape(B, d)
           .astype(jnp.float32))

    # Pair consecutive blocks -> lane-dense (rows, 128).  Contiguous reshape.
    if B % 2:
        xb = jnp.pad(xb, ((0, 1), (0, 0)))
    rows = xb.shape[0] // 2
    xr = xb.reshape(rows, lanes)

    # Pick the number of tiles first, then the tile height (8-aligned), so the
    # worst-case padding is < 8 rows per tile.  Default target ~2048 rows
    # (1 MiB in + 1 MiB out per step; double-buffered footprint ~4.2 MiB).
    g = max(1, pl.cdiv(rows, tile_rows))
    TR = pl.cdiv(pl.cdiv(rows, g), 8) * 8
    rows_p = g * TR
    if rows_p != rows:
        xr = jnp.pad(xr, ((0, rows_p - rows), (0, 0)))

    out = pl.pallas_call(
        _dct_kernel,
        out_shape=jax.ShapeDtypeStruct((rows_p, lanes), jnp.float32),
        grid_spec=pltpu.PrefetchScalarGridSpec(
            num_scalar_prefetch=0,
            grid=(g,),
            in_specs=[
                pl.BlockSpec((lanes, lanes), lambda i: (0, 0)),  # operator, resident
                pl.BlockSpec((TR, lanes), lambda i: (i, 0)),     # data tile
            ],
            out_specs=pl.BlockSpec((TR, lanes), lambda i: (i, 0)),
        ),
        compiler_params=pltpu.CompilerParams(
            dimension_semantics=("parallel",),          # shards across v7x TCs
            allow_input_fusion=[False, True],           # fuse the unfold transpose
        ),
    )(Wop, xr)

    # Free (contiguous) reshapes back to the PyTorch output layout.
    coeff = out[:rows].reshape(2 * rows, d)[:B].reshape(N, k, bs, bs)
    return coeff


def _reference(x, A, bs):
    """Pure-JAX reference mirroring the PyTorch forward."""
    N, _, H, W = x.shape
    kh, kw = H // bs, W // bs
    xb = (x.reshape(N, kh, bs, kw, bs)
           .transpose(0, 1, 3, 2, 4)
           .reshape(N, kh * kw, bs, bs))
    return jnp.einsum('im,nkmp,jp->nkij', A, xb, A)


if __name__ == "__main__":
    blocksize = 8
    A64 = make_dct_matrix(blocksize)                   # numpy f64 (exact basis)
    A = jnp.asarray(A64, dtype=jnp.float32)

    key = jax.random.PRNGKey(0)
    fwd = jax.jit(lambda xx: dct2d_forward(xx, A64, blocksize=blocksize))

    # Case 1: 2x1x16x16 -> k = 4 blocks per image (even total block count).
    x1 = jax.random.normal(key, (2, 1, 16, 16), dtype=jnp.float32)
    coeff1 = jax.block_until_ready(fwd(x1))
    ref1 = _reference(x1, A, blocksize)
    assert coeff1.shape == (2, 4, blocksize, blocksize)
    err1 = float(jnp.max(jnp.abs(coeff1 - ref1)))
    assert err1 < 1e-4, f"max abs error too large (case 1): {err1}"

    # Case 2: 1x1x40x24 -> k = 15 blocks (odd total; exercises pad paths).
    x2 = jax.random.normal(jax.random.PRNGKey(1), (1, 1, 40, 24),
                           dtype=jnp.float32)
    coeff2 = jax.block_until_ready(
        jax.jit(lambda xx: dct2d_forward(xx, A64, blocksize=blocksize))(x2))
    ref2 = _reference(x2, A, blocksize)
    assert coeff2.shape == (1, 15, blocksize, blocksize)
    err2 = float(jnp.max(jnp.abs(coeff2 - ref2)))
    assert err2 < 1e-4, f"max abs error too large (case 2): {err2}"

    print("KERNEL_OK")
</pallas_src>

<mosaic_0001>
module attributes {stable_mosaic.version = 11 : i64} {
  func.func @_dct_kernel(%arg0: i32, %arg1: memref<128x128xf32, #tpu.memory_space<vmem>>, %arg2: memref<8x128xf32, #tpu.memory_space<vmem>>, %arg3: memref<8x128xf32, #tpu.memory_space<vmem>>) attributes {dimension_semantics = [#tpu.dimension_semantics<parallel>], iteration_bounds = array<i64: 1>, scalar_prefetch = 0 : i64, scratch_operands = 0 : i64, tpu.core_type = #tpu.core_type<tc>, window_params = [{pipeline_mode = #tpu.pipeline_mode<synchronous>, transform_indices = @transform_0, window_bounds = array<i64: 128, 128>}, {transform_indices = @transform_1, window_bounds = array<i64: 8, 128>}, {transform_indices = @transform_2, window_bounds = array<i64: 8, 128>}]} {
    %c0 = arith.constant 0 : index
    %c0_0 = arith.constant 0 : index
    %0 = vector.load %arg2[%c0, %c0_0] : memref<8x128xf32, #tpu.memory_space<vmem>>, vector<8x128xf32>
    %c0_1 = arith.constant 0 : index
    %c0_2 = arith.constant 0 : index
    %1 = vector.load %arg1[%c0_1, %c0_2] : memref<128x128xf32, #tpu.memory_space<vmem>>, vector<128x128xf32>
    %cst = arith.constant dense<0.000000e+00> : vector<8x128xf32>
    %2 = tpu.matmul %0, %1, %cst {dimension_numbers = #tpu.dot_dimension_numbers<[1], [0], [0], [1], [0, 0, 1, 1], [], []>} : vector<8x128xf32>, vector<128x128xf32>, vector<8x128xf32> -> vector<8x128xf32>
    %c0_3 = arith.constant 0 : index
    %c0_4 = arith.constant 0 : index
    %3 = vector.load %arg3[%c0_3, %c0_4] : memref<8x128xf32, #tpu.memory_space<vmem>>, vector<8x128xf32>
    tpu.vector_store %arg3[%c0_3, %c0_4], %2 {strides = array<i32>} : memref<8x128xf32, #tpu.memory_space<vmem>>, vector<8x128xf32>,
    return
  }
  func.func @transform_0(%arg0: i32) -> (i32, i32) {
    %c0_i32 = arith.constant 0 : i32
    %c0_i32_0 = arith.constant 0 : i32
    %c0_i32_1 = arith.constant 0 : i32
    return %c0_i32, %c0_i32_0 : i32, i32
  }
  func.func @transform_1(%arg0: i32) -> (i32, i32) {
    %c0_i32 = arith.constant 0 : i32
    %c0_i32_0 = arith.constant 0 : i32
    return %arg0, %c0_i32 : i32, i32
  }
  func.func @transform_2(%arg0: i32) -> (i32, i32) {
    %c0_i32 = arith.constant 0 : i32
    %c0_i32_0 = arith.constant 0 : i32
    return %arg0, %c0_i32 : i32, i32
  }
}

</mosaic_0001>

<llo_original>
// kernel: _lambda_.2
$region0: #{_lambda_.2}
  #allocation0 [shape = 'u32[]', space=smem, size = 0x4, offset = 0x4, fixed_abs, tag = 'smem constant byte address 0x4 - core index']
  #allocation1 [shape = 'u32[144,128]{1,0:T(1,128)}', space=vmem, size = 0x12000, scoped, tag = 'internal scratch']
  #allocation2 [shape = 'u32[2048]{0}', space=vmem, size = 0x2000, scoped, tag = 'scoped memory for _lambda_.2']
  #allocation3 [shape = 'u32[2048]{0}', space=vmem, size = 0x2000, scoped, tag = 'scoped memory for _lambda_.2']
  #allocation4 [shape = 'u32[2048]{0}', space=vmem, size = 0x2000, scoped, tag = 'scoped memory for _lambda_.2']
  #allocation5 [shape = 'u32[2048]{0}', space=vmem, size = 0x2000, scoped, tag = 'scoped memory for _lambda_.2']
  #allocation6 [shape = 'u32[2048]{0}', space=vmem, size = 0x2000, scoped, tag = 'scoped memory for _lambda_.2']
  %s0 = inlined_call_operand.vmem [shape: f32[128,128], index: 0, kind: input, shape index: {}]
  %s1 = inlined_call_operand.vmem [shape: f32[4,128], index: 1, kind: input, shape index: {}]
  %s2 = inlined_call_operand.<no memory space> [shape: f32[], index: 2, kind: input, shape index: {}]
  %s3 = inlined_call_operand.vmem [shape: f32[8,128], index: 3, kind: output, shape index: {}]
  %s4 = sld [smem:[#allocation0]]
  $region18: #{_lambda_.2} parent=0
    _
  %s6 = ssub.s32 1, %s4
  %s7 = scalar_select 0, %s6, %s4
  %v8 = vstv %s2
  $region1: #{_lambda_.2} parent=0
    #allocation7 [shape = 'u8[4096]{0}', space=vmem, size = 0x1000, dematerialized = true, scoped, tag = 'FusionAdapter Buffer %fusion.1 = f32[8,128]{1,0:T(8,128)} fusion(%param_1.1, %param_2), kind=kLoop, calls=%fused_computation.2.clone, metadata={op_name="jit(<lambda>)/jit(_pad)/pad" stack_frame_id=11}']
    // Predicated region
    $region2: #{_lambda_.2} parent=1 // pred_check
      _
    $region3: #{_lambda_.2} parent=1 // pred_check_branch
      %10 = sbr.rel (0) target = $region5
    $region4: #{_lambda_.2} parent=1 // pred_region
      _
    $region5: #{_lambda_.2} parent=1 // pred_fallthru
      _
    // Predicated region
    $region6: #{_lambda_.2} parent=1 // pred_check
      _
    $region7: #{_lambda_.2} parent=1 // pred_check_branch
      %12 = sbr.rel (0) target = $region9
    $region8: #{_lambda_.2} parent=1 // pred_region
      _
    $region9: #{_lambda_.2} parent=1 // pred_fallthru
      _
    %v13 = vld [vmem:[%s1] sm:$0xf]
    %v14 = vlaneseq
    %v15 = vshrl.u32 %v14, 7
    %vm17 = vcmp.lt.s32.totalorder %v15, 4
    %v18 = vsel %vm17, %v13, %v8
    %20 = vst [vmem:[#allocation7] sm:$0xff] %v18
    %v21 = vld [vmem:[#allocation7] sm:$0xff]
    %v22 = vld [vmem:[%s0] sm:$0xff]
    %v23 = vld [vmem:[%s0 + $0x8] sm:$0xff]
    %v24 = vld [vmem:[%s0 + $0x10] sm:$0xff]
    %v25 = vld [vmem:[%s0 + $0x18] sm:$0xff]
    %v26 = vld [vmem:[%s0 + $0x20] sm:$0xff]
    %v27 = vld [vmem:[%s0 + $0x28] sm:$0xff]
    %v28 = vld [vmem:[%s0 + $0x30] sm:$0xff]
    %v29 = vld [vmem:[%s0 + $0x38] sm:$0xff]
    %v30 = vld [vmem:[%s0 + $0x40] sm:$0xff]
    %v31 = vld [vmem:[%s0 + $0x48] sm:$0xff]
    %v32 = vld [vmem:[%s0 + $0x50] sm:$0xff]
    %v33 = vld [vmem:[%s0 + $0x58] sm:$0xff]
    %v34 = vld [vmem:[%s0 + $0x60] sm:$0xff]
    %v35 = vld [vmem:[%s0 + $0x68] sm:$0xff]
    %v36 = vld [vmem:[%s0 + $0x70] sm:$0xff]
    %v37 = vld [vmem:[%s0 + $0x78] sm:$0xff]
    %38 = vmatprep.subr.mxu0 0.0
    %39 = vmatpush1.msra.mxu0 %v22
    %40 = vmatprep.subr.mxu0 0.0
    %41 = vmatpush1.msra.mxu0 %v23
    %42 = vmatprep.subr.mxu0 0.0
    %43 = vmatpush1.msra.mxu0 %v24
    %44 = vmatprep.subr.mxu0 0.0
    %45 = vmatpush1.msra.mxu0 %v25
    %46 = vmatprep.subr.mxu0 0.0
    %47 = vmatpush1.msra.mxu0 %v26
    %48 = vmatprep.subr.mxu0 0.0
    %49 = vmatpush1.msra.mxu0 %v27
    %50 = vmatprep.subr.mxu0 0.0
    %51 = vmatpush1.msra.mxu0 %v28
    %52 = vmatprep.subr.mxu0 0.0
    %53 = vmatpush1.msra.mxu0 %v29
    %54 = vmatprep.subr.mxu0 0.0
    %55 = vmatpush1.msra.mxu0 %v30
    %56 = vmatprep.subr.mxu0 0.0
    %57 = vmatpush1.msra.mxu0 %v31
    %58 = vmatprep.subr.mxu0 0.0
    %59 = vmatpush1.msra.mxu0 %v32
    %60 = vmatprep.subr.mxu0 0.0
    %61 = vmatpush1.msra.mxu0 %v33
    %62 = vmatprep.subr.mxu0 0.0
    %63 = vmatpush1.msra.mxu0 %v34
    %64 = vmatprep.subr.mxu0 0.0
    %65 = vmatpush1.msra.mxu0 %v35
    %66 = vmatprep.subr.mxu0 0.0
    %67 = vmatpush1.msra.mxu0 %v36
    %68 = vmatprep.subr.mxu0 0.0
    %69 = vmatpush1.msra.mxu0 %v37
    %70 = vmatprep.subr.mxu0 0.0
    %71 = vmatpush1.msra.mxu0 0.0
    %72 = vmatprep.subr.mxu0 0.0
    %73 = vmatpush1.msra.mxu0 0.0
    %74 = vmatprep.subr.mxu0 0.0
    %75 = vmatpush1.msra.mxu0 0.0
    %76 = vmatprep.subr.mxu0 0.0
    %77 = vmatpush1.msra.mxu0 0.0
    %78 = vmatprep.subr.mxu0 0.0
    %79 = vmatpush1.msra.mxu0 0.0
    %80 = vmatprep.subr.mxu0 0.0
    %81 = vmatpush1.msra.mxu0 0.0
    %82 = vmatprep.subr.mxu0 0.0
    %83 = vmatpush1.msra.mxu0 0.0
    %84 = vmatprep.subr.mxu0 0.0
    %85 = vmatpush1.msra.mxu0 0.0
    %86 = vmatprep.subr.mxu0 0.0
    %87 = vmatpush1.msra.mxu0 0.0
    %88 = vmatprep.subr.mxu0 0.0
    %89 = vmatpush1.msra.mxu0 0.0
    %90 = vmatprep.subr.mxu0 0.0
    %91 = vmatpush1.msra.mxu0 0.0
    %92 = vmatprep.subr.mxu0 0.0
    %93 = vmatpush1.msra.mxu0 0.0
    %94 = vmatprep.subr.mxu0 0.0
    %95 = vmatpush1.msra.mxu0 0.0
    %96 = vmatprep.subr.mxu0 0.0
    %97 = vmatpush1.msra.mxu0 0.0
    %98 = vmatprep.subr.mxu0 0.0
    %99 = vmatpush1.msra.mxu0 0.0
    %100 = vmatprep.subr.mxu0 0.0
    %101 = vmatpush1.msra.mxu0 0.0
    %102 = vmatprep.mubr.f32.mxu0 0.0
    %103 = vmatmul.mubr.f32.gmra.mrb[0].mxu0 %v21
    %v104 = vpop.f32.mrb[0].mxu0
    %v105 = vadd.f32 0.0, %v104
    %v106 = vpop.f32.mrb[0].mxu0
    %107 = vdwg.mxu0
    %108 = vst [vmem:[%s3] sm:$0xff] %v105
    // Predicated region
    $region10: #{_lambda_.2} parent=1 // pred_check
      _
    $region11: #{_lambda_.2} parent=1 // pred_check_branch
      %110 = sbr.rel (0) target = $region13
    $region12: #{_lambda_.2} parent=1 // pred_region
      _
    $region13: #{_lambda_.2} parent=1 // pred_fallthru
      _
    // Predicated region
    $region14: #{_lambda_.2} parent=1 // pred_check
      _
    $region15: #{_lambda_.2} parent=1 // pred_check_branch
      %112 = sbr.rel (0) target = $region17
    $region16: #{_lambda_.2} parent=1 // pred_region
      _
    $region17: #{_lambda_.2} parent=1 // pred_fallthru
      _

</llo_original>
